<compile_context>
chip_gen: v5e
topology: v5e:2x2
jax: 0.10.0
libtpu: 0.0.40
codegen_flags: <defaults>
</compile_context>

<pallas_src>
import functools

import jax
import jax.numpy as jnp
from jax.experimental import pallas as pl
from jax.experimental.pallas import tpu as pltpu


def _residual_kernel(seed_ref, x_ref, o_ref, *,
                     eps, alpha, bias, p, training, tile_rows):
    x = x_ref[...].astype(jnp.float32)                 # (TM, D)
    d = x.shape[-1]

    # --- LayerNormalization (reference formula) ---
    mean = jnp.mean(x, axis=-1, keepdims=True)
    denom = max(d - 1, 1)                              # torch.std is unbiased (ddof=1)
    var = jnp.sum((x - mean) ** 2, axis=-1, keepdims=True) * (1.0 / denom)
    std = jnp.sqrt(var)
    inv = jax.lax.rsqrt(std + eps)                     # per-row (TM,1); EUP, cheap
    normed = alpha * (x - mean) * inv + bias

    # --- sublayer (identity; see TODO above) ---
    sub = normed

    # --- dropout (train mode: inverted dropout, in-kernel hash PRNG) ---
    if training and p > 0.0:
        if p >= 1.0:
            sub = jnp.zeros_like(sub)
        else:
            row0 = pl.program_id(0) * tile_rows        # global row offset of this tile
            r = (jax.lax.broadcasted_iota(jnp.int32, sub.shape, 0) + row0
                 ).astype(jnp.uint32)
            c = jax.lax.broadcasted_iota(jnp.int32, sub.shape, 1).astype(jnp.uint32)
            seed_u32 = seed_ref[0].astype(jnp.uint32)
            # murmur3-style mix of (global row, col, seed) -> uniform uint32
            h = (r * jnp.uint32(0x9E3779B1)) ^ (c * jnp.uint32(0x85EBCA77)) ^ seed_u32
            h = h ^ (h >> 16)
            h = h * jnp.uint32(0x85EBCA6B)
            h = h ^ (h >> 13)
            h = h * jnp.uint32(0xC2B2AE35)
            h = h ^ (h >> 16)
            thresh = jnp.uint32(int(p * 4294967296.0))  # keep iff h >= p * 2^32
            scale = jnp.float32(1.0 / (1.0 - p))
            sub = jnp.where(h >= thresh, sub * scale, jnp.float32(0.0))

    # --- residual add ---
    o_ref[...] = (x + sub).astype(o_ref.dtype)


def residual_connection(x, *, dropout_p=0.1, training=True, seed=0,
                        eps=1e-6, alpha=1.0, bias=0.0, tile_rows=None):
    """x: (batch, seq, d_model). Returns x + dropout(sublayer(norm(x)))."""
    B, S, D = x.shape
    rows = B * S
    x2 = x.reshape(rows, D)

    # Pick a large, HBM-efficient row tile: ~2 MiB of f32 working set per block
    # (comfortable on v7x's 64 MiB VMEM, ample on v5e/v6e), rounded to a
    # multiple of 8 sublanes, never more than the (padded) row count.
    if tile_rows is None:
        target_bytes = 2 * 1024 * 1024
        tile_rows = max(8, target_bytes // (D * 4))
    tile_rows = int(min(tile_rows, max(rows, 8)))
    tile_rows = max(8, (tile_rows // 8) * 8)

    grid = pl.cdiv(rows, tile_rows)
    rows_padded = grid * tile_rows
    if rows_padded != rows:
        # Zero-pad the tail tile; padded rows are harmless (no NaNs: eps > 0)
        # and sliced off below.
        x2 = jnp.pad(x2, ((0, rows_padded - rows), (0, 0)))

    # Scoped-VMEM budget: double-buffered in/out blocks + f32 intermediates.
    io_block = tile_rows * D * x.dtype.itemsize
    f32_block = tile_rows * D * 4
    vmem_limit = int(min(64 * 1024 * 1024,
                         max(16 * 1024 * 1024,
                             4 * io_block + 10 * f32_block + (1 << 20))))

    kernel = functools.partial(
        _residual_kernel,
        eps=float(eps), alpha=float(alpha), bias=float(bias),
        p=float(dropout_p), training=bool(training), tile_rows=int(tile_rows),
    )

    seed_arr = jnp.array([seed], dtype=jnp.int32)

    out = pl.pallas_call(
        kernel,
        out_shape=jax.ShapeDtypeStruct((rows_padded, D), x.dtype),
        grid_spec=pltpu.PrefetchScalarGridSpec(
            num_scalar_prefetch=1,
            grid=(grid,),
            in_specs=[pl.BlockSpec((tile_rows, D), lambda i, seed: (i, 0))],
            out_specs=pl.BlockSpec((tile_rows, D), lambda i, seed: (i, 0)),
        ),
        compiler_params=pltpu.CompilerParams(
            dimension_semantics=("parallel",),     # no cross-step dependency
            vmem_limit_bytes=vmem_limit,
        ),
    )(seed_arr, x2)

    if rows_padded != rows:
        out = out[:rows]
    return out.reshape(B, S, D)


if __name__ == "__main__":
    key = jax.random.PRNGKey(0)
    batch, seq, d_model = 2, 8, 32
    x = jax.random.normal(key, (batch, seq, d_model), dtype=jnp.float32)

    # Training-mode run (dropout active).
    out = residual_connection(x, dropout_p=0.1, training=True, seed=0)
    out = jax.block_until_ready(out)
    assert out.shape == (batch, seq, d_model)
    assert out.dtype == x.dtype
    assert bool(jnp.all(jnp.isfinite(out)))

    # Eval-mode correctness vs. a pure-JAX reference of the module's formula.
    out_eval = residual_connection(x, dropout_p=0.1, training=False, seed=0)
    out_eval = jax.block_until_ready(out_eval)
    mean = jnp.mean(x, axis=-1, keepdims=True)
    std = jnp.std(x, axis=-1, keepdims=True, ddof=1)
    ref = x + (1.0 * (x - mean) / jnp.sqrt(std + 1e-6) + 0.0)
    assert bool(jnp.allclose(out_eval, ref, atol=1e-3, rtol=1e-3))

    print("KERNEL_OK")
</pallas_src>

<mosaic_0001>
module attributes {stable_mosaic.version = 11 : i64} {
  func.func @_residual_kernel(%arg0: i32, %arg1: memref<1xi32, #tpu.memory_space<smem>>, %arg2: memref<16x32xf32, #tpu.memory_space<vmem>>, %arg3: memref<16x32xf32, #tpu.memory_space<vmem>>) attributes {dimension_semantics = [#tpu.dimension_semantics<parallel>], iteration_bounds = array<i64: 1>, scalar_prefetch = 1 : i64, scratch_operands = 0 : i64, tpu.core_type = #tpu.core_type<tc>, window_params = [{transform_indices = @transform_0, window_bounds = array<i64: 16, 32>}, {transform_indices = @transform_1, window_bounds = array<i64: 16, 32>}]} {
    %c0 = arith.constant 0 : index
    %c0_0 = arith.constant 0 : index
    %0 = vector.load %arg2[%c0, %c0_0] : memref<16x32xf32, #tpu.memory_space<vmem>>, vector<16x32xf32>
    %cst = arith.constant dense<0.000000e+00> : vector<16xf32>
    %1 = vector.multi_reduction <add>, %0, %cst [1] : vector<16x32xf32> to vector<16xf32>
    %2 = vector.shape_cast %1 : vector<16xf32> to vector<16x1xf32>
    %cst_1 = arith.constant 3.200000e+01 : f32
    %3 = vector.broadcast %cst_1 : f32 to vector<16x1xf32>
    %4 = arith.divf %2, %3 : vector<16x1xf32>
    %5 = vector.broadcast %4 : vector<16x1xf32> to vector<16x32xf32>
    %6 = arith.subf %0, %5 : vector<16x32xf32>
    %7 = arith.mulf %6, %6 : vector<16x32xf32>
    %cst_2 = arith.constant dense<0.000000e+00> : vector<16xf32>
    %8 = vector.multi_reduction <add>, %7, %cst_2 [1] : vector<16x32xf32> to vector<16xf32>
    %9 = vector.shape_cast %8 : vector<16xf32> to vector<16x1xf32>
    %cst_3 = arith.constant 0.0322580636 : f32
    %10 = vector.broadcast %cst_3 : f32 to vector<16x1xf32>
    %11 = arith.mulf %9, %10 : vector<16x1xf32>
    %12 = math.sqrt %11 : vector<16x1xf32>
    %cst_4 = arith.constant 9.99999997E-7 : f32
    %13 = vector.broadcast %cst_4 : f32 to vector<16x1xf32>
    %14 = arith.addf %12, %13 : vector<16x1xf32>
    %15 = math.rsqrt %14 : vector<16x1xf32>
    %16 = vector.broadcast %4 : vector<16x1xf32> to vector<16x32xf32>
    %17 = arith.subf %0, %16 : vector<16x32xf32>
    %cst_5 = arith.constant 1.000000e+00 : f32
    %18 = vector.broadcast %cst_5 : f32 to vector<16x32xf32>
    %19 = arith.mulf %18, %17 : vector<16x32xf32>
    %20 = vector.broadcast %15 : vector<16x1xf32> to vector<16x32xf32>
    %21 = arith.mulf %19, %20 : vector<16x32xf32>
    %cst_6 = arith.constant 0.000000e+00 : f32
    %22 = vector.broadcast %cst_6 : f32 to vector<16x32xf32>
    %23 = arith.addf %21, %22 : vector<16x32xf32>
    %c16_i32 = arith.constant 16 : i32
    %24 = arith.muli %arg0, %c16_i32 : i32
    %25 = tpu.iota {dimensions = array<i32: 0>} : vector<16x32xi32>
    %26 = vector.broadcast %24 : i32 to vector<16x32xi32>
    %27 = arith.addi %25, %26 : vector<16x32xi32>
    %28 = tpu.iota {dimensions = array<i32: 1>} : vector<16x32xi32>
    %c0_7 = arith.constant 0 : index
    %29 = memref.load %arg1[%c0_7] : memref<1xi32, #tpu.memory_space<smem>>
    %c-1640531535_i32 = arith.constant -1640531535 : i32
    %30 = vector.broadcast %c-1640531535_i32 : i32 to vector<16x32xi32>
    %31 = arith.muli %27, %30 : vector<16x32xi32>
    %c-2048144777_i32 = arith.constant -2048144777 : i32
    %32 = vector.broadcast %c-2048144777_i32 : i32 to vector<16x32xi32>
    %33 = arith.muli %28, %32 : vector<16x32xi32>
    %34 = arith.xori %31, %33 : vector<16x32xi32>
    %35 = vector.broadcast %29 : i32 to vector<16x32xi32>
    %36 = arith.xori %34, %35 : vector<16x32xi32>
    %c16_i32_8 = arith.constant 16 : i32
    %37 = vector.broadcast %c16_i32_8 : i32 to vector<16x32xi32>
    %38 = arith.shrui %36, %37 : vector<16x32xi32>
    %39 = arith.xori %36, %38 : vector<16x32xi32>
    %c-2048144789_i32 = arith.constant -2048144789 : i32
    %40 = vector.broadcast %c-2048144789_i32 : i32 to vector<16x32xi32>
    %41 = arith.muli %39, %40 : vector<16x32xi32>
    %c13_i32 = arith.constant 13 : i32
    %42 = vector.broadcast %c13_i32 : i32 to vector<16x32xi32>
    %43 = arith.shrui %41, %42 : vector<16x32xi32>
    %44 = arith.xori %41, %43 : vector<16x32xi32>
    %c-1028477387_i32 = arith.constant -1028477387 : i32
    %45 = vector.broadcast %c-1028477387_i32 : i32 to vector<16x32xi32>
    %46 = arith.muli %44, %45 : vector<16x32xi32>
    %c16_i32_9 = arith.constant 16 : i32
    %47 = vector.broadcast %c16_i32_9 : i32 to vector<16x32xi32>
    %48 = arith.shrui %46, %47 : vector<16x32xi32>
    %49 = arith.xori %46, %48 : vector<16x32xi32>
    %c429496729_i32 = arith.constant 429496729 : i32
    %50 = vector.broadcast %c429496729_i32 : i32 to vector<16x32xi32>
    %51 = arith.cmpi uge, %49, %50 : vector<16x32xi32>
    %cst_10 = arith.constant 1.11111116 : f32
    %52 = vector.broadcast %cst_10 : f32 to vector<16x32xf32>
    %53 = arith.mulf %23, %52 : vector<16x32xf32>
    %cst_11 = arith.constant 0.000000e+00 : f32
    %54 = vector.broadcast %cst_11 : f32 to vector<16x32xf32>
    %55 = arith.select %51, %53, %54 : vector<16x32xi1>, vector<16x32xf32>
    %56 = arith.addf %0, %55 : vector<16x32xf32>
    %c0_12 = arith.constant 0 : index
    %c0_13 = arith.constant 0 : index
    %57 = vector.load %arg3[%c0_12, %c0_13] : memref<16x32xf32, #tpu.memory_space<vmem>>, vector<16x32xf32>
    tpu.vector_store %arg3[%c0_12, %c0_13], %56 {strides = array<i32>} : memref<16x32xf32, #tpu.memory_space<vmem>>, vector<16x32xf32>,
    return
  }
  func.func @transform_0(%arg0: i32, %arg1: memref<1xi32, #tpu.memory_space<smem>>) -> (i32, i32) {
    %c0_i32 = arith.constant 0 : i32
    %c0_i32_0 = arith.constant 0 : i32
    return %arg0, %c0_i32 : i32, i32
  }
  func.func @transform_1(%arg0: i32, %arg1: memref<1xi32, #tpu.memory_space<smem>>) -> (i32, i32) {
    %c0_i32 = arith.constant 0 : i32
    %c0_i32_0 = arith.constant 0 : i32
    return %arg0, %c0_i32 : i32, i32
  }
}

</mosaic_0001>

<llo_original>
// kernel: tpu_custom_call.1
$region0: #{tpu_custom_call.1}
  #allocation0 [shape = 'u32[]', space=smem, size = 0x4, offset = 0x4, fixed_abs, tag = 'smem constant byte address 0x4 - core index']
  #allocation1 [shape = 'u32[72,128]{1,0:T(1,128)}', space=vmem, size = 0x9000, scoped, tag = 'internal scratch']
  #allocation2 [shape = 's32[1]{0}', space=sflag, size = 0x4, scoped, tag = 'scoped memory for tpu_custom_call.1']
  #allocation3 [shape = 's32[1]{0:T(128)S(6)}', space=smem, size = 0x200, scoped, tag = 'prefetched SMEM operand 0']
  %s0 = inlined_call_operand.<no memory space> [shape: s32[1], index: 0, kind: input, shape index: {}]
  %s1 = inlined_call_operand.hbm [shape: f32[16,32], index: 1, kind: input, shape index: {}]
  %s2 = inlined_call_operand.hbm [shape: f32[16,32], index: 2, kind: output, shape index: {}]
  %s3 = sld [smem:[#allocation0]]
  $region18: #{tpu_custom_call.1} parent=0
    _
  %s5 = ssub.s32 1, %s3
  %s6 = scalar_select 0, %s5, %s3
  %7 = sst [smem:[#allocation3]] %s0
  $region1: #{tpu_custom_call.1} parent=0
    #allocation4 [shape = 'u8[8192]{0}', space=vmem, size = 0x2000, scoped, tag = 'input window, operand 1, single buffered']
    #allocation5 [shape = 's32[1]{0}', space=sflag, size = 0x4, scoped, tag = 'scoped memory for tpu_custom_call.1']
    #allocation6 [shape = 's32[1]{0}', space=sflag, size = 0x4, scoped, tag = 'scoped memory for tpu_custom_call.1']
    #allocation7 [shape = 'u8[8192]{0}', space=vmem, size = 0x2000, scoped, tag = 'output window, operand 0, single buffered']
    %8 = vsyncpa [#allocation5], 0
    %9 = vsyncpa [#allocation6], 0
    // Predicated region
    $region2: #{tpu_custom_call.1} parent=1 // pred_check
      _
    $region3: #{tpu_custom_call.1} parent=1 // pred_check_branch
      %11 = sbr.rel (0) target = $region5
    $region4: #{tpu_custom_call.1} parent=1 // pred_region
      %13 = vsyncadd [#allocation5], 0
      %s14 = sshll.u32 %s1, 4
      %s15 = int_to_ptr.hbm [resolvable:$true] %s14
      %s16 = sshll.u32 [#allocation4], 4
      %s17 = int_to_ptr.vmem [resolvable:$true] %s16
      %22 = dma.hbm_to_vmem [thread:$0]  %s15, 256, %s17, [#allocation5], 128, 128, 8
    $region5: #{tpu_custom_call.1} parent=1 // pred_fallthru
      _
    // Predicated region
    $region6: #{tpu_custom_call.1} parent=1 // pred_check
      _
    $region7: #{tpu_custom_call.1} parent=1 // pred_check_branch
      %24 = sbr.rel (0) target = $region9
    $region8: #{tpu_custom_call.1} parent=1 // pred_region
      %26 = dma.done [#allocation5], 256
    $region9: #{tpu_custom_call.1} parent=1 // pred_fallthru
      _
    %v27 = vld [vmem:[#allocation4] sm:$0xff]
    %v28 = vld [vmem:[#allocation4 + $0x8] sm:$0xff]
    %vm29 = vcmask 261120
    %v30 = vsel %vm29, %v27, 0.0
    %31 = vadd.xlane.f32.xlu0 %v30
    %v32 = vpop.xlane.xlu0 %31
    %v33 = vsel %vm29, %v28, 0.0
    %34 = vadd.xlane.f32.xlu0 %v33
    %v35 = vpop.xlane.xlu0 %34
    %v36 = vrcp.pop 32.0
    %v37 = vmul.f32 32.0, %v36
    %v38 = vsub.f32 1.0, %v37
    %v39 = vmul.f32 %v36, %v38
    %v40 = vadd.f32 %v36, %v39
    %vm41 = vweird.f32 %v36
    %v42 = vsel %vm41, %v36, %v40
    %v43 = vmul.f32 %v32, %v42
    %v44 = vmul.f32 %v35, %v42
    %v45 = vsub.f32 %v27, %v43
    %v46 = vsub.f32 %v28, %v44
    %v47 = vmul.f32 %v45, %v45
    %v48 = vmul.f32 %v46, %v46
    %v49 = vsel %vm29, %v47, 0.0
    %50 = vadd.xlane.f32.xlu0 %v49
    %v51 = vpop.xlane.xlu0 %50
    %v52 = vsel %vm29, %v48, 0.0
    %53 = vadd.xlane.f32.xlu0 %v52
    %v54 = vpop.xlane.xlu0 %53
    %v55 = vmul.f32 %v51, 0.032258064
    %v56 = vmul.f32 %v54, 0.032258064
    %v57 = vrsqrt.pop %v55
    %v58 = vmul.f32 %v57, %v55
    %v59 = vmul.f32 %v58, %v57
    %v60 = vmul.f32 0.5, %v59
    %v61 = vsub.f32 1.5, %v60
    %v62 = vmul.f32 %v57, %v61
    %v63 = vmul.f32 %v55, %v62
    %vm64 = vcmp.eq.f32.partialorder %v55, inf
    %v65 = vsel %vm64, %v55, %v63
    %vm66 = vcmp.eq.f32.partialorder %v55, 0.0
    %v67 = vand.u32 %v55, 2147483648
    %v68 = vsel %vm66, %v67, %v65
    %v69 = vrsqrt.pop %v56
    %v70 = vmul.f32 %v69, %v56
    %v71 = vmul.f32 %v70, %v69
    %v72 = vmul.f32 0.5, %v71
    %v73 = vsub.f32 1.5, %v72
    %v74 = vmul.f32 %v69, %v73
    %v75 = vmul.f32 %v56, %v74
    %vm76 = vcmp.eq.f32.partialorder %v56, inf
    %v77 = vsel %vm76, %v56, %v75
    %vm78 = vcmp.eq.f32.partialorder %v56, 0.0
    %v79 = vand.u32 %v56, 2147483648
    %v80 = vsel %vm78, %v79, %v77
    %v81 = vadd.f32 %v68, 1e-06
    %v82 = vadd.f32 %v80, 1e-06
    %v83 = vrsqrt.pop %v81
    %v84 = vmul.f32 %v83, %v81
    %v85 = vmul.f32 %v84, %v83
    %v86 = vmul.f32 0.5, %v85
    %v87 = vsub.f32 1.5, %v86
    %v88 = vmul.f32 %v83, %v87
    %vm89 = vweird.f32 %v81
    %vm90 = vweird.f32 %v83
    %vm91 = vmor %vm89, %vm90
    %v92 = vsel %vm91, %v83, %v88
    %v93 = vrsqrt.pop %v82
    %v94 = vmul.f32 %v93, %v82
    %v95 = vmul.f32 %v94, %v93
    %v96 = vmul.f32 0.5, %v95
    %v97 = vsub.f32 1.5, %v96
    %v98 = vmul.f32 %v93, %v97
    %vm99 = vweird.f32 %v82
    %vm100 = vweird.f32 %v93
    %vm101 = vmor %vm99, %vm100
    %v102 = vsel %vm101, %v93, %v98
    %v103 = vmul.f32 %v45, %v92
    %v104 = vmul.f32 %v46, %v102
    %v105 = vadd.f32 %v103, 0.0
    %v106 = vadd.f32 %v104, 0.0
    %s107 = smul.u32 0, 16
    %v108 = vlaneseq
    %v109 = vshrl.u32 %v108, 7
    %v110 = vadd.s32 %v109, 8
    %v111 = vstv %s107
    %v112 = vadd.s32 %v109, %v111
    %v113 = vadd.s32 %v110, %v111
    %v114 = vlaneseq
    %v115 = vand.u32 %v114, 127
    %s116 = sld [smem:[#allocation3]]
    %v117 = vmul.u32 %v112, 2654435761
    %v118 = vmul.u32 %v113, 2654435761
    %v119 = vmul.u32 %v115, 2246822519
    %v120 = vxor.u32 %v117, %v119
    %v121 = vxor.u32 %v118, %v119
    %v122 = vstv %s116
    %v123 = vxor.u32 %v120, %v122
    %v124 = vxor.u32 %v121, %v122
    %v125 = vshrl.u32 %v123, 16
    %v126 = vshrl.u32 %v124, 16
    %v127 = vxor.u32 %v123, %v125
    %v128 = vxor.u32 %v124, %v126
    %v129 = vmul.u32 %v127, 2246822507
    %v130 = vmul.u32 %v128, 2246822507
    %v131 = vshrl.u32 %v129, 13
    %v132 = vshrl.u32 %v130, 13
    %v133 = vxor.u32 %v129, %v131
    %v134 = vxor.u32 %v130, %v132
    %v135 = vmul.u32 %v133, 3266489909
    %v136 = vmul.u32 %v134, 3266489909
    %v137 = vshrl.u32 %v135, 16
    %v138 = vshrl.u32 %v136, 16
    %v139 = vxor.u32 %v135, %v137
    %v140 = vxor.u32 %v136, %v138
    %v141 = vadd.s32 %v139, 2147483648
    %vm143 = vcmp.ge.s32.totalorder %v141, 2576980377
    %v144 = vadd.s32 %v140, 2147483648
    %vm146 = vcmp.ge.s32.totalorder %v144, 2576980377
    %v147 = vmul.f32 %v105, 1.1111112
    %v148 = vmul.f32 %v106, 1.1111112
    %v149 = vsel %vm143, %v147, 0.0
    %v150 = vsel %vm146, %v148, 0.0
    %v151 = vadd.f32 %v27, %v149
    %v152 = vadd.f32 %v28, %v150
    %153 = vst.msk [vmem:[#allocation7] sm:$0xff] %vm29, %v151
    %154 = vst.msk [vmem:[#allocation7 + $0x8] sm:$0xff] %vm29, %v152
    // Predicated region
    $region10: #{tpu_custom_call.1} parent=1 // pred_check
      _
    $region11: #{tpu_custom_call.1} parent=1 // pred_check_branch
      %156 = sbr.rel (0) target = $region13
    $region12: #{tpu_custom_call.1} parent=1 // pred_region
      %158 = vsyncadd [#allocation6], 0
      %s159 = sshll.u32 [#allocation7], 4
      %s160 = int_to_ptr.vmem [resolvable:$true] %s159
      %s161 = sshll.u32 %s2, 4
      %s162 = int_to_ptr.hbm [resolvable:$true] %s161
      %167 = dma.vmem_to_hbm [thread:$0]  %s160, 256, %s162, [#allocation6], 128, 128, 8
    $region13: #{tpu_custom_call.1} parent=1 // pred_fallthru
      _
    // Predicated region
    $region14: #{tpu_custom_call.1} parent=1 // pred_check
      _
    $region15: #{tpu_custom_call.1} parent=1 // pred_check_branch
      %169 = sbr.rel (0) target = $region17
    $region16: #{tpu_custom_call.1} parent=1 // pred_region
      %171 = dma.done [#allocation6], 256
    $region17: #{tpu_custom_call.1} parent=1 // pred_fallthru
      _
    %172 = vsyncpa [#allocation5], 1
    %173 = vsyncpa [#allocation6], 1

</llo_original>
